<compile_context>
chip_gen: v5e
topology: v5e:2x2
jax: 0.10.0
libtpu: 0.0.40
codegen_flags: <defaults>
</compile_context>

<pallas_src>
import functools
import math

import jax
import jax.numpy as jnp
from jax.experimental import pallas as pl
from jax.experimental.pallas import tpu as pltpu

HIDDEN = 512
EPS = 1e-5
LANES = 128


def _round_up(x, m):
    return ((x + m - 1) // m) * m


def generator_kernel(x_ref, w1_ref, w2_ref, vecs_ref, o_ref, *, n_pad):
    # ---- Linear(n_input, 512): bf16 operands, f32 accumulation on the MXU.
    # (b1 is omitted: training-mode BN's mean subtraction cancels it exactly.)
    h = jnp.dot(x_ref[...], w1_ref[...],
                preferred_element_type=jnp.float32)            # (B, 512) f32

    # ---- BatchNorm1d(512), training mode (biased batch variance), folded
    # into a single per-feature scale/shift: y = h * s + t.
    mean = jnp.mean(h, axis=0, keepdims=True)                  # (1, 512)
    hc = h - mean                                              # centered (stable)
    var = jnp.mean(hc * hc, axis=0, keepdims=True)             # (1, 512)
    gamma = vecs_ref[0:1, :HIDDEN]                             # (1, 512)
    beta = vecs_ref[1:2, :HIDDEN]                              # (1, 512)
    s = gamma * jax.lax.rsqrt(var + EPS)                       # rsqrt -> EUP
    t = beta - mean * s
    h_relu = jnp.maximum(h * s + t, 0.0)                       # BN + ReLU

    # ---- Linear(512, n_input_padded): bf16 operands, f32 accumulation.
    out = jnp.dot(h_relu.astype(jnp.bfloat16), w2_ref[...],
                  preferred_element_type=jnp.float32)          # (B, n_pad)
    b2 = vecs_ref[2:3, :n_pad]                                 # (1, n_pad)
    o_ref[...] = (out + b2).astype(o_ref.dtype)


def generator_forward(x, kparams):
    """x: (B, n_input) f32. kparams: {'w1','w2','vecs'} (padded/packed)."""
    B, n_input = x.shape
    n_pad = kparams["w2"].shape[1]

    # Lane-dense feature axis (zero pad) + bf16 cast for the MXU.
    x_p = jnp.pad(x, ((0, 0), (0, n_pad - n_input))).astype(jnp.bfloat16)

    vmem = pl.BlockSpec(memory_space=pltpu.MemorySpace.VMEM)
    flops = 4 * B * HIDDEN * n_pad  # two matmuls, 2*M*N*K each
    bytes_accessed = (x_p.size * 2 + kparams["w1"].size * 2
                      + kparams["w2"].size * 2 + kparams["vecs"].size * 4
                      + B * n_pad * 4)

    out_pad = pl.pallas_call(
        functools.partial(generator_kernel, n_pad=n_pad),
        out_shape=jax.ShapeDtypeStruct((B, n_pad), jnp.float32),
        in_specs=[vmem, vmem, vmem, vmem],
        out_specs=vmem,
        compiler_params=pltpu.CompilerParams(
            vmem_limit_bytes=48 * 1024 * 1024),
        cost_estimate=pl.CostEstimate(flops=flops, transcendentals=HIDDEN,
                                      bytes_accessed=bytes_accessed),
    )(x_p, kparams["w1"], kparams["w2"], kparams["vecs"])

    return out_pad[:, :n_input]


def init_params(key, n_input):
    """PyTorch-like init. Returns (kernel_params, raw_f32_params)."""
    n_pad = _round_up(n_input, LANES)
    k1, k2, k3, k4 = jax.random.split(key, 4)
    bound1 = 1.0 / math.sqrt(n_input)
    bound2 = 1.0 / math.sqrt(HIDDEN)

    w1 = jax.random.uniform(k1, (n_input, HIDDEN), jnp.float32, -bound1, bound1)
    b1 = jax.random.uniform(k2, (1, HIDDEN), jnp.float32, -bound1, bound1)
    gamma = jnp.ones((1, HIDDEN), jnp.float32)
    beta = jnp.zeros((1, HIDDEN), jnp.float32)
    w2 = jax.random.uniform(k3, (HIDDEN, n_input), jnp.float32, -bound2, bound2)
    b2 = jax.random.uniform(k4, (1, n_input), jnp.float32, -bound2, bound2)

    # Kernel-side params: bf16 weights, feature axis zero-padded to n_pad,
    # small per-feature vectors packed into one (3, P) f32 array.
    w1_p = jnp.zeros((n_pad, HIDDEN), jnp.bfloat16)
    w1_p = w1_p.at[:n_input, :].set(w1.astype(jnp.bfloat16))
    w2_p = jnp.zeros((HIDDEN, n_pad), jnp.bfloat16)
    w2_p = w2_p.at[:, :n_input].set(w2.astype(jnp.bfloat16))
    P = max(HIDDEN, n_pad)
    vecs = jnp.zeros((3, P), jnp.float32)
    vecs = vecs.at[0, :HIDDEN].set(gamma[0])
    vecs = vecs.at[1, :HIDDEN].set(beta[0])
    vecs = vecs.at[2, :n_input].set(b2[0])

    kparams = {"w1": w1_p, "w2": w2_p, "vecs": vecs}
    raw = {"w1": w1, "b1": b1, "gamma": gamma, "beta": beta, "w2": w2, "b2": b2}
    return kparams, raw


def reference_forward(x, raw):
    """Pure-JAX reference with full PyTorch semantics (b1 included).

    Matmul operands are rounded to bf16 to mirror the MXU operand precision;
    accumulation and everything else is f32.
    """
    f32 = jnp.float32
    hi = jax.lax.Precision.HIGHEST
    xq = x.astype(jnp.bfloat16).astype(f32)
    w1q = raw["w1"].astype(jnp.bfloat16).astype(f32)
    w2q = raw["w2"].astype(jnp.bfloat16).astype(f32)

    h = jnp.dot(xq, w1q, precision=hi) + raw["b1"]
    mean = jnp.mean(h, axis=0, keepdims=True)
    var = jnp.mean((h - mean) ** 2, axis=0, keepdims=True)
    h = (h - mean) / jnp.sqrt(var + EPS)
    h = h * raw["gamma"] + raw["beta"]
    h = jnp.maximum(h, 0.0)
    hq = h.astype(jnp.bfloat16).astype(f32)
    return jnp.dot(hq, w2q, precision=hi) + raw["b2"]


if __name__ == "__main__":
    # B >= 128 rows per call (fills MXU rows, amortizes launch overhead).
    # Note: BatchNorm1d training mode requires B > 1.
    B, n_input = 128, 32
    key = jax.random.PRNGKey(0)
    kx, kp = jax.random.split(key)
    x = jax.random.normal(kx, (B, n_input), jnp.float32)
    kparams, raw = init_params(kp, n_input)

    fwd = jax.jit(generator_forward)
    out = jax.block_until_ready(fwd(x, kparams))

    ref = reference_forward(x, raw)
    assert out.shape == (B, n_input)
    max_err = float(jnp.max(jnp.abs(out - ref)))
    # Tolerance reflects bf16 matmul operands (f32 accumulation) in the kernel.
    assert jnp.allclose(out, ref, atol=5e-3, rtol=5e-3), max_err

    print("KERNEL_OK")
</pallas_src>

<mosaic_0001>
module attributes {stable_mosaic.version = 11 : i64} {
  func.func @generator_kernel(%arg0: memref<128x128xbf16, #tpu.memory_space<vmem>>, %arg1: memref<128x512xbf16, #tpu.memory_space<vmem>>, %arg2: memref<512x128xbf16, #tpu.memory_space<vmem>>, %arg3: memref<3x512xf32, #tpu.memory_space<vmem>>, %arg4: memref<128x128xf32, #tpu.memory_space<vmem>>) attributes {dimension_semantics = [], scalar_prefetch = 0 : i64, scratch_operands = 0 : i64, tpu.core_type = #tpu.core_type<tc>} {
    %c0 = arith.constant 0 : index
    %c0_0 = arith.constant 0 : index
    %0 = vector.load %arg0[%c0, %c0_0] : memref<128x128xbf16, #tpu.memory_space<vmem>>, vector<128x128xbf16>
    %c0_1 = arith.constant 0 : index
    %c0_2 = arith.constant 0 : index
    %1 = vector.load %arg1[%c0_1, %c0_2] : memref<128x512xbf16, #tpu.memory_space<vmem>>, vector<128x512xbf16>
    %cst = arith.constant dense<0.000000e+00> : vector<128x512xf32>
    %2 = tpu.matmul %0, %1, %cst {dimension_numbers = #tpu.dot_dimension_numbers<[1], [0], [0], [1], [0, 0, 1, 1], [], []>} : vector<128x128xbf16>, vector<128x512xbf16>, vector<128x512xf32> -> vector<128x512xf32>
    %cst_3 = arith.constant dense<0.000000e+00> : vector<512xf32>
    %3 = vector.multi_reduction <add>, %2, %cst_3 [0] : vector<128x512xf32> to vector<512xf32>
    %4 = vector.shape_cast %3 : vector<512xf32> to vector<1x512xf32>
    %cst_4 = arith.constant 1.280000e+02 : f32
    %5 = vector.broadcast %cst_4 : f32 to vector<1x512xf32>
    %6 = arith.divf %4, %5 : vector<1x512xf32>
    %7 = vector.broadcast %6 : vector<1x512xf32> to vector<128x512xf32>
    %8 = arith.subf %2, %7 : vector<128x512xf32>
    %9 = arith.mulf %8, %8 : vector<128x512xf32>
    %cst_5 = arith.constant dense<0.000000e+00> : vector<512xf32>
    %10 = vector.multi_reduction <add>, %9, %cst_5 [0] : vector<128x512xf32> to vector<512xf32>
    %11 = vector.shape_cast %10 : vector<512xf32> to vector<1x512xf32>
    %cst_6 = arith.constant 1.280000e+02 : f32
    %12 = vector.broadcast %cst_6 : f32 to vector<1x512xf32>
    %13 = arith.divf %11, %12 : vector<1x512xf32>
    %c0_7 = arith.constant 0 : index
    %c0_8 = arith.constant 0 : index
    %14 = vector.load %arg3[%c0_7, %c0_8] : memref<3x512xf32, #tpu.memory_space<vmem>>, vector<1x512xf32>
    %c1 = arith.constant 1 : index
    %c0_9 = arith.constant 0 : index
    %15 = vector.load %arg3[%c1, %c0_9] : memref<3x512xf32, #tpu.memory_space<vmem>>, vector<1x512xf32>
    %cst_10 = arith.constant 9.99999974E-6 : f32
    %16 = vector.broadcast %cst_10 : f32 to vector<1x512xf32>
    %17 = arith.addf %13, %16 : vector<1x512xf32>
    %18 = math.rsqrt %17 : vector<1x512xf32>
    %19 = arith.mulf %14, %18 : vector<1x512xf32>
    %20 = arith.mulf %6, %19 : vector<1x512xf32>
    %21 = arith.subf %15, %20 : vector<1x512xf32>
    %22 = vector.broadcast %19 : vector<1x512xf32> to vector<128x512xf32>
    %23 = arith.mulf %2, %22 : vector<128x512xf32>
    %24 = vector.broadcast %21 : vector<1x512xf32> to vector<128x512xf32>
    %25 = arith.addf %23, %24 : vector<128x512xf32>
    %cst_11 = arith.constant 0.000000e+00 : f32
    %26 = vector.broadcast %cst_11 : f32 to vector<128x512xf32>
    %27 = arith.maximumf %25, %26 : vector<128x512xf32>
    %28 = arith.truncf %27 : vector<128x512xf32> to vector<128x512xbf16>
    %c0_12 = arith.constant 0 : index
    %c0_13 = arith.constant 0 : index
    %29 = vector.load %arg2[%c0_12, %c0_13] : memref<512x128xbf16, #tpu.memory_space<vmem>>, vector<512x128xbf16>
    %cst_14 = arith.constant dense<0.000000e+00> : vector<128x128xf32>
    %30 = tpu.matmul %28, %29, %cst_14 {dimension_numbers = #tpu.dot_dimension_numbers<[1], [0], [0], [1], [0, 0, 1, 1], [], []>} : vector<128x512xbf16>, vector<512x128xbf16>, vector<128x128xf32> -> vector<128x128xf32>
    %c2 = arith.constant 2 : index
    %c0_15 = arith.constant 0 : index
    %31 = vector.load %arg3[%c2, %c0_15] : memref<3x512xf32, #tpu.memory_space<vmem>>, vector<1x128xf32>
    %32 = vector.broadcast %31 : vector<1x128xf32> to vector<128x128xf32>
    %33 = arith.addf %30, %32 : vector<128x128xf32>
    %c0_16 = arith.constant 0 : index
    %c0_17 = arith.constant 0 : index
    %34 = vector.load %arg4[%c0_16, %c0_17] : memref<128x128xf32, #tpu.memory_space<vmem>>, vector<128x128xf32>
    tpu.vector_store %arg4[%c0_16, %c0_17], %33 {strides = array<i32>} : memref<128x128xf32, #tpu.memory_space<vmem>>, vector<128x128xf32>,
    return
  }
}

</mosaic_0001>

<llo_original>
// kernel: generator_forward.1
$region0: #{generator_forward.1}
  #allocation0 [shape = 'u32[]', space=smem, size = 0x4, offset = 0x4, fixed_abs, tag = 'smem constant byte address 0x4 - core index']
  #allocation1 [shape = 'u32[72,128]{1,0:T(1,128)}', space=vmem, size = 0x9000, scoped, tag = 'internal scratch']
  %s0 = inlined_call_operand.vmem [shape: bf16[128,128], index: 0, kind: input, shape index: {}]
  %s1 = inlined_call_operand.vmem [shape: bf16[128,512], index: 1, kind: input, shape index: {}]
  %s2 = inlined_call_operand.hbm [shape: bf16[512,128], index: 2, kind: input, shape index: {}]
  %s3 = inlined_call_operand.hbm [shape: f32[3,512], index: 3, kind: input, shape index: {}]
  %s4 = inlined_call_operand.vmem [shape: f32[128,128], index: 4, kind: output, shape index: {}]
  %s5 = sld [smem:[#allocation0]]
  $region34: #{generator_forward.1} parent=0
    _
  %s7 = ssub.s32 1, %s5
  %s8 = scalar_select 0, %s7, %s5
  $region1: #{generator_forward.1} parent=0
    #allocation2 [shape = 'u8[131072]{0}', space=vmem, size = 0x20000, scoped, tag = 'input window, operand 2, single buffered']
    #allocation3 [shape = 's32[1]{0}', space=sflag, size = 0x4, scoped, tag = 'scoped memory for generator_forward.1']
    #allocation4 [shape = 'u8[8192]{0}', space=vmem, size = 0x2000, scoped, tag = 'input window, operand 3, single buffered']
    #allocation5 [shape = 's32[1]{0}', space=sflag, size = 0x4, scoped, tag = 'scoped memory for generator_forward.1']
    %9 = vsyncpa [#allocation3], 0
    %10 = vsyncpa [#allocation5], 0
    // Predicated region
    $region2: #{generator_forward.1} parent=1 // pred_check
      _
    $region3: #{generator_forward.1} parent=1 // pred_check_branch
      %12 = sbr.rel (0) target = $region5
    $region4: #{generator_forward.1} parent=1 // pred_region
      _
    $region5: #{generator_forward.1} parent=1 // pred_fallthru
      _
    // Predicated region
    $region6: #{generator_forward.1} parent=1 // pred_check
      _
    $region7: #{generator_forward.1} parent=1 // pred_check_branch
      %14 = sbr.rel (0) target = $region9
    $region8: #{generator_forward.1} parent=1 // pred_region
      _
    $region9: #{generator_forward.1} parent=1 // pred_fallthru
      _
    // Predicated region
    $region10: #{generator_forward.1} parent=1 // pred_check
      _
    $region11: #{generator_forward.1} parent=1 // pred_check_branch
      %16 = sbr.rel (0) target = $region13
    $region12: #{generator_forward.1} parent=1 // pred_region
      %18 = vsyncadd [#allocation3], 0
      %s19 = sshll.u32 %s2, 4
      %s20 = int_to_ptr.hbm [resolvable:$true] %s19
      %s21 = sshll.u32 [#allocation2], 4
      %s22 = int_to_ptr.vmem [resolvable:$true] %s21
      %27 = dma.hbm_to_vmem [thread:$0]  %s20, 4096, %s22, [#allocation3], 64, 64, 4
    $region13: #{generator_forward.1} parent=1 // pred_fallthru
      _
    // Predicated region
    $region14: #{generator_forward.1} parent=1 // pred_check
      _
    $region15: #{generator_forward.1} parent=1 // pred_check_branch
      %29 = sbr.rel (0) target = $region17
    $region16: #{generator_forward.1} parent=1 // pred_region
      %31 = vsyncadd [#allocation5], 0
      %s33 = sshll.u32 %s3, 4
      %s34 = int_to_ptr.hbm [resolvable:$true] %s33
      %s35 = sshll.u32 [#allocation4], 4
      %s36 = int_to_ptr.vmem [resolvable:$true] %s35
      %38 = dma.hbm_to_vmem [thread:$0]  %s34, 256, %s36, [#allocation5]
    $region17: #{generator_forward.1} parent=1 // pred_fallthru
      _
    // Predicated region
    $region18: #{generator_forward.1} parent=1 // pred_check
      _
    $region19: #{generator_forward.1} parent=1 // pred_check_branch
      %40 = sbr.rel (0) target = $region21
    $region20: #{generator_forward.1} parent=1 // pred_region
      %42 = dma.done [#allocation3], 4096
    $region21: #{generator_forward.1} parent=1 // pred_fallthru
      _
    // Predicated region
    $region22: #{generator_forward.1} parent=1 // pred_check
      _
    $region23: #{generator_forward.1} parent=1 // pred_check_branch
      %44 = sbr.rel (0) target = $region25
    $region24: #{generator_forward.1} parent=1 // pred_region
      %46 = dma.done [#allocation5], 256
    $region25: #{generator_forward.1} parent=1 // pred_fallthru
      _
    %v47 = vld [vmem:[%s0] sm:$0xf]
    %v48 = vld [vmem:[%s0 + $0x4] sm:$0xf]
    %v49 = vld [vmem:[%s0 + $0x8] sm:$0xf]
    %v50 = vld [vmem:[%s0 + $0xc] sm:$0xf]
    %v51 = vld [vmem:[%s0 + $0x10] sm:$0xf]
    %v52 = vld [vmem:[%s0 + $0x14] sm:$0xf]
    %v53 = vld [vmem:[%s0 + $0x18] sm:$0xf]
    %v54 = vld [vmem:[%s0 + $0x1c] sm:$0xf]
    %v55 = vld [vmem:[%s0 + $0x20] sm:$0xf]
    %v56 = vld [vmem:[%s0 + $0x24] sm:$0xf]
    %v57 = vld [vmem:[%s0 + $0x28] sm:$0xf]
    %v58 = vld [vmem:[%s0 + $0x2c] sm:$0xf]
    %v59 = vld [vmem:[%s0 + $0x30] sm:$0xf]
    %v60 = vld [vmem:[%s0 + $0x34] sm:$0xf]
    %v61 = vld [vmem:[%s0 + $0x38] sm:$0xf]
    %v62 = vld [vmem:[%s0 + $0x3c] sm:$0xf]
    %v63 = vld [vmem:[%s1] sm:$0xff]
    %v64 = vld [vmem:[%s1 + $0x8] sm:$0xff]
    %v65 = vld [vmem:[%s1 + $0x10] sm:$0xff]
    %v66 = vld [vmem:[%s1 + $0x18] sm:$0xff]
    %v67 = vld [vmem:[%s1 + $0x20] sm:$0xff]
    %v68 = vld [vmem:[%s1 + $0x28] sm:$0xff]
    %v69 = vld [vmem:[%s1 + $0x30] sm:$0xff]
    %v70 = vld [vmem:[%s1 + $0x38] sm:$0xff]
    %v71 = vld [vmem:[%s1 + $0x40] sm:$0xff]
    %v72 = vld [vmem:[%s1 + $0x48] sm:$0xff]
    %v73 = vld [vmem:[%s1 + $0x50] sm:$0xff]
    %v74 = vld [vmem:[%s1 + $0x58] sm:$0xff]
    %v75 = vld [vmem:[%s1 + $0x60] sm:$0xff]
    %v76 = vld [vmem:[%s1 + $0x68] sm:$0xff]
    %v77 = vld [vmem:[%s1 + $0x70] sm:$0xff]
    %v78 = vld [vmem:[%s1 + $0x78] sm:$0xff]
    %v79 = vld [vmem:[%s1 + $0x80] sm:$0xff]
    %v80 = vld [vmem:[%s1 + $0x88] sm:$0xff]
    %v81 = vld [vmem:[%s1 + $0x90] sm:$0xff]
    %v82 = vld [vmem:[%s1 + $0x98] sm:$0xff]
    %v83 = vld [vmem:[%s1 + $0xa0] sm:$0xff]
    %v84 = vld [vmem:[%s1 + $0xa8] sm:$0xff]
    %v85 = vld [vmem:[%s1 + $0xb0] sm:$0xff]
    %v86 = vld [vmem:[%s1 + $0xb8] sm:$0xff]
    %v87 = vld [vmem:[%s1 + $0xc0] sm:$0xff]
    %v88 = vld [vmem:[%s1 + $0xc8] sm:$0xff]
    %v89 = vld [vmem:[%s1 + $0xd0] sm:$0xff]
    %v90 = vld [vmem:[%s1 + $0xd8] sm:$0xff]
    %v91 = vld [vmem:[%s1 + $0xe0] sm:$0xff]
    %v92 = vld [vmem:[%s1 + $0xe8] sm:$0xff]
    %v93 = vld [vmem:[%s1 + $0xf0] sm:$0xff]
    %v94 = vld [vmem:[%s1 + $0xf8] sm:$0xff]
    %v111 = vunpack.c.l.b16 %v47
    %v112 = vunpack.c.l.b16 %v48
    %v113 = vunpack.c.l.b16 %v49
    %v114 = vunpack.c.l.b16 %v50
    %v115 = vunpack.c.l.b16 %v51
    %v116 = vunpack.c.l.b16 %v52
    %v117 = vunpack.c.l.b16 %v53
    %v118 = vunpack.c.l.b16 %v54
    %v119 = vunpack.c.l.b16 %v55
    %v120 = vunpack.c.l.b16 %v56
    %v121 = vunpack.c.l.b16 %v57
    %v122 = vunpack.c.l.b16 %v58
    %v123 = vunpack.c.l.b16 %v59
    %v124 = vunpack.c.l.b16 %v60
    %v125 = vunpack.c.l.b16 %v61
    %v126 = vunpack.c.l.b16 %v62
    %v127 = vpack.c.b16 %v112, %v111
    %v128 = vpack.c.b16 %v114, %v113
    %v129 = vpack.c.b16 %v116, %v115
    %v130 = vpack.c.b16 %v118, %v117
    %v131 = vpack.c.b16 %v120, %v119
    %v132 = vpack.c.b16 %v122, %v121
    %v133 = vpack.c.b16 %v124, %v123
    %v134 = vpack.c.b16 %v126, %v125
    %v175 = vunpack.c.l.b16 %v63
    %v176 = vunpack.c.h.b16 %v63
    %v177 = vunpack.c.l.b16 %v64
    %v178 = vunpack.c.h.b16 %v64
    %v179 = vunpack.c.l.b16 %v65
    %v180 = vunpack.c.h.b16 %v65
    %v181 = vunpack.c.l.b16 %v66
    %v182 = vunpack.c.h.b16 %v66
    %v183 = vunpack.c.l.b16 %v67
    %v184 = vunpack.c.h.b16 %v67
    %v185 = vunpack.c.l.b16 %v68
    %v186 = vunpack.c.h.b16 %v68
    %v187 = vunpack.c.l.b16 %v69
    %v188 = vunpack.c.h.b16 %v69
    %v189 = vunpack.c.l.b16 %v70
    %v190 = vunpack.c.h.b16 %v70
    %v191 = vunpack.c.l.b16 %v71
    %v192 = vunpack.c.h.b16 %v71
    %v193 = vunpack.c.l.b16 %v72
    %v194 = vunpack.c.h.b16 %v72
    %v195 = vunpack.c.l.b16 %v73
    %v196 = vunpack.c.h.b16 %v73
    %v197 = vunpack.c.l.b16 %v74
    %v198 = vunpack.c.h.b16 %v74
    %v199 = vunpack.c.l.b16 %v75
    %v200 = vunpack.c.h.b16 %v75
    %v201 = vunpack.c.l.b16 %v76
    %v202 = vunpack.c.h.b16 %v76
    %v203 = vunpack.c.l.b16 %v77
    %v204 = vunpack.c.h.b16 %v77
    %v205 = vunpack.c.l.b16 %v78
    %v206 = vunpack.c.h.b16 %v78
    %v207 = vunpack.c.l.b16 %v79
    %v208 = vunpack.c.h.b16 %v79
    %v209 = vunpack.c.l.b16 %v80
    %v210 = vunpack.c.h.b16 %v80
    %v211 = vunpack.c.l.b16 %v81
    %v212 = vunpack.c.h.b16 %v81
    %v213 = vunpack.c.l.b16 %v82
    %v214 = vunpack.c.h.b16 %v82
    %v215 = vunpack.c.l.b16 %v83
    %v216 = vunpack.c.h.b16 %v83
    %v217 = vunpack.c.l.b16 %v84
    %v218 = vunpack.c.h.b16 %v84
    %v219 = vunpack.c.l.b16 %v85
    %v220 = vunpack.c.h.b16 %v85
    %v221 = vunpack.c.l.b16 %v86
    %v222 = vunpack.c.h.b16 %v86
    %v223 = vunpack.c.l.b16 %v87
    %v224 = vunpack.c.h.b16 %v87
    %v225 = vunpack.c.l.b16 %v88
    %v226 = vunpack.c.h.b16 %v88
    %v227 = vunpack.c.l.b16 %v89
    %v228 = vunpack.c.h.b16 %v89
    %v229 = vunpack.c.l.b16 %v90
    %v230 = vunpack.c.h.b16 %v90
    %v231 = vunpack.c.l.b16 %v91
    %v232 = vunpack.c.h.b16 %v91
    %v233 = vunpack.c.l.b16 %v92
    %v234 = vunpack.c.h.b16 %v92
    %v235 = vunpack.c.l.b16 %v93
    %v236 = vunpack.c.h.b16 %v93
    %v237 = vunpack.c.l.b16 %v94
    %v238 = vunpack.c.h.b16 %v94
    %v239 = vpack.c.b16 %v179, %v175
    %v240 = vpack.c.b16 %v180, %v176
    %v241 = vpack.c.b16 %v181, %v177
    %v242 = vpack.c.b16 %v182, %v178
    %v243 = vpack.c.b16 %v187, %v183
    %v244 = vpack.c.b16 %v188, %v184
    %v245 = vpack.c.b16 %v189, %v185
    %v246 = vpack.c.b16 %v190, %v186
    %v247 = vpack.c.b16 %v195, %v191
    %v248 = vpack.c.b16 %v196, %v192
    %v249 = vpack.c.b16 %v197, %v193
    %v250 = vpack.c.b16 %v198, %v194
    %v251 = vpack.c.b16 %v203, %v199
    %v252 = vpack.c.b16 %v204, %v200
    %v253 = vpack.c.b16 %v205, %v201
    %v254 = vpack.c.b16 %v206, %v202
    %v255 = vpack.c.b16 %v211, %v207
    %v256 = vpack.c.b16 %v212, %v208
    %v257 = vpack.c.b16 %v213, %v209
    %v258 = vpack.c.b16 %v214, %v210
    %v259 = vpack.c.b16 %v219, %v215
    %v260 = vpack.c.b16 %v220, %v216
    %v261 = vpack.c.b16 %v221, %v217
    %v262 = vpack.c.b16 %v222, %v218
    %v263 = vpack.c.b16 %v227, %v223
    %v264 = vpack.c.b16 %v228, %v224
    %v265 = vpack.c.b16 %v229, %v225
    %v266 = vpack.c.b16 %v230, %v226
    %v267 = vpack.c.b16 %v235, %v231
    %v268 = vpack.c.b16 %v236, %v232
    %v269 = vpack.c.b16 %v237, %v233
    %v270 = vpack.c.b16 %v238, %v234
    %303 = vmatpush.bf16.msra.mxu0 %v267
    %304 = vmatpush.bf16.msra.mxu0 %v263
    %305 = vmatpush.bf16.msra.mxu0 %v259
    %306 = vmatpush.bf16.msra.mxu0 %v255
    %307 = vmatpush.bf16.msra.mxu0 %v251
    %308 = vmatpush.bf16.msra.mxu0 %v247
    %309 = vmatpush.bf16.msra.mxu0 %v243
    %310 = vmatpush.bf16.msra.mxu0 %v239
    %311 = vmatmul.bf16.gmra.mxu0 %v127
    %v312 = vpop.f32.mrf.mxu0
    %v313 = vadd.f32 0.0, %v312
    %v314 = vpop.f32.mrf.mxu0
    %v315 = vadd.f32 0.0, %v314
    %316 = vmatmul.bf16.gmra.mxu0 %v128
    %v317 = vpop.f32.mrf.mxu0
    %v318 = vadd.f32 0.0, %v317
    %v319 = vpop.f32.mrf.mxu0
    %v320 = vadd.f32 0.0, %v319
    %321 = vmatmul.bf16.gmra.mxu0 %v129
    %v322 = vpop.f32.mrf.mxu0
    %v323 = vadd.f32 0.0, %v322
    %v324 = vpop.f32.mrf.mxu0
    %v325 = vadd.f32 0.0, %v324
    %326 = vmatmul.bf16.gmra.mxu0 %v130
    %v327 = vpop.f32.mrf.mxu0
    %v328 = vadd.f32 0.0, %v327
    %v329 = vpop.f32.mrf.mxu0
    %v330 = vadd.f32 0.0, %v329
    %331 = vmatmul.bf16.gmra.mxu0 %v131
    %v332 = vpop.f32.mrf.mxu0
    %v333 = vadd.f32 0.0, %v332
    %v334 = vpop.f32.mrf.mxu0
    %v335 = vadd.f32 0.0, %v334
    %336 = vmatmul.bf16.gmra.mxu0 %v132
    %v337 = vpop.f32.mrf.mxu0
    %v338 = vadd.f32 0.0, %v337
    %v339 = vpop.f32.mrf.mxu0
    %v340 = vadd.f32 0.0, %v339
    %341 = vmatmul.bf16.gmra.mxu0 %v133
    %v342 = vpop.f32.mrf.mxu0
    %v343 = vadd.f32 0.0, %v342
    %v344 = vpop.f32.mrf.mxu0
    %v345 = vadd.f32 0.0, %v344
    %346 = vmatmul.bf16.gmra.mxu0 %v134
    %v347 = vpop.f32.mrf.mxu0
    %v348 = vadd.f32 0.0, %v347
    %v349 = vpop.f32.mrf.mxu0
    %v350 = vadd.f32 0.0, %v349
    %351 = vdwg.mxu0
    %352 = vmatpush.bf16.msra.mxu0 %v268
    %353 = vmatpush.bf16.msra.mxu0 %v264
    %354 = vmatpush.bf16.msra.mxu0 %v260
    %355 = vmatpush.bf16.msra.mxu0 %v256
    %356 = vmatpush.bf16.msra.mxu0 %v252
    %357 = vmatpush.bf16.msra.mxu0 %v248
    %358 = vmatpush.bf16.msra.mxu0 %v244
    %359 = vmatpush.bf16.msra.mxu0 %v240
    %360 = vmatmul.bf16.gmra.mxu0 %v127
    %v361 = vpop.f32.mrf.mxu0
    %v362 = vadd.f32 0.0, %v361
    %v363 = vpop.f32.mrf.mxu0
    %v364 = vadd.f32 0.0, %v363
    %365 = vmatmul.bf16.gmra.mxu0 %v128
    %v366 = vpop.f32.mrf.mxu0
    %v367 = vadd.f32 0.0, %v366
    %v368 = vpop.f32.mrf.mxu0
    %v369 = vadd.f32 0.0, %v368
    %370 = vmatmul.bf16.gmra.mxu0 %v129
    %v371 = vpop.f32.mrf.mxu0
    %v372 = vadd.f32 0.0, %v371
    %v373 = vpop.f32.mrf.mxu0
    %v374 = vadd.f32 0.0, %v373
    %375 = vmatmul.bf16.gmra.mxu0 %v130
    %v376 = vpop.f32.mrf.mxu0
    %v377 = vadd.f32 0.0, %v376
    %v378 = vpop.f32.mrf.mxu0
    %v379 = vadd.f32 0.0, %v378
    %380 = vmatmul.bf16.gmra.mxu0 %v131
    %v381 = vpop.f32.mrf.mxu0
    %v382 = vadd.f32 0.0, %v381
    %v383 = vpop.f32.mrf.mxu0
    %v384 = vadd.f32 0.0, %v383
    %385 = vmatmul.bf16.gmra.mxu0 %v132
    %v386 = vpop.f32.mrf.mxu0
    %v387 = vadd.f32 0.0, %v386
    %v388 = vpop.f32.mrf.mxu0
    %v389 = vadd.f32 0.0, %v388
    %390 = vmatmul.bf16.gmra.mxu0 %v133
    %v391 = vpop.f32.mrf.mxu0
    %v392 = vadd.f32 0.0, %v391
    %v393 = vpop.f32.mrf.mxu0
    %v394 = vadd.f32 0.0, %v393
    %395 = vmatmul.bf16.gmra.mxu0 %v134
    %v396 = vpop.f32.mrf.mxu0
    %v397 = vadd.f32 0.0, %v396
    %v398 = vpop.f32.mrf.mxu0
    %v399 = vadd.f32 0.0, %v398
    %400 = vdwg.mxu0
    %401 = vmatpush.bf16.msra.mxu0 %v269
    %402 = vmatpush.bf16.msra.mxu0 %v265
    %403 = vmatpush.bf16.msra.mxu0 %v261
    %404 = vmatpush.bf16.msra.mxu0 %v257
    %405 = vmatpush.bf16.msra.mxu0 %v253
    %406 = vmatpush.bf16.msra.mxu0 %v249
    %407 = vmatpush.bf16.msra.mxu0 %v245
    %408 = vmatpush.bf16.msra.mxu0 %v241
    %409 = vmatmul.bf16.gmra.mxu0 %v127
    %v410 = vpop.f32.mrf.mxu0
    %v411 = vadd.f32 0.0, %v410
    %v412 = vpop.f32.mrf.mxu0
    %v413 = vadd.f32 0.0, %v412
    %414 = vmatmul.bf16.gmra.mxu0 %v128
    %v415 = vpop.f32.mrf.mxu0
    %v416 = vadd.f32 0.0, %v415
    %v417 = vpop.f32.mrf.mxu0
    %v418 = vadd.f32 0.0, %v417
    %419 = vmatmul.bf16.gmra.mxu0 %v129
    %v420 = vpop.f32.mrf.mxu0
    %v421 = vadd.f32 0.0, %v420
    %v422 = vpop.f32.mrf.mxu0
    %v423 = vadd.f32 0.0, %v422
    %424 = vmatmul.bf16.gmra.mxu0 %v130
    %v425 = vpop.f32.mrf.mxu0
    %v426 = vadd.f32 0.0, %v425
    %v427 = vpop.f32.mrf.mxu0
    %v428 = vadd.f32 0.0, %v427
    %429 = vmatmul.bf16.gmra.mxu0 %v131
    %v430 = vpop.f32.mrf.mxu0
    %v431 = vadd.f32 0.0, %v430
    %v432 = vpop.f32.mrf.mxu0
    %v433 = vadd.f32 0.0, %v432
    %434 = vmatmul.bf16.gmra.mxu0 %v132
    %v435 = vpop.f32.mrf.mxu0
    %v436 = vadd.f32 0.0, %v435
    %v437 = vpop.f32.mrf.mxu0
    %v438 = vadd.f32 0.0, %v437
    %439 = vmatmul.bf16.gmra.mxu0 %v133
    %v440 = vpop.f32.mrf.mxu0
    %v441 = vadd.f32 0.0, %v440
    %v442 = vpop.f32.mrf.mxu0
    %v443 = vadd.f32 0.0, %v442
    %444 = vmatmul.bf16.gmra.mxu0 %v134
    %v445 = vpop.f32.mrf.mxu0
    %v446 = vadd.f32 0.0, %v445
    %v447 = vpop.f32.mrf.mxu0
    %v448 = vadd.f32 0.0, %v447
    %449 = vdwg.mxu0
    %450 = vmatpush.bf16.msra.mxu0 %v270
    %451 = vmatpush.bf16.msra.mxu0 %v266
    %452 = vmatpush.bf16.msra.mxu0 %v262
    %453 = vmatpush.bf16.msra.mxu0 %v258
    %454 = vmatpush.bf16.msra.mxu0 %v254
    %455 = vmatpush.bf16.msra.mxu0 %v250
    %456 = vmatpush.bf16.msra.mxu0 %v246
    %457 = vmatpush.bf16.msra.mxu0 %v242
    %458 = vmatmul.bf16.gmra.mxu0 %v127
    %v459 = vpop.f32.mrf.mxu0
    %v460 = vadd.f32 0.0, %v459
    %v461 = vpop.f32.mrf.mxu0
    %v462 = vadd.f32 0.0, %v461
    %463 = vmatmul.bf16.gmra.mxu0 %v128
    %v464 = vpop.f32.mrf.mxu0
    %v465 = vadd.f32 0.0, %v464
    %v466 = vpop.f32.mrf.mxu0
    %v467 = vadd.f32 0.0, %v466
    %468 = vmatmul.bf16.gmra.mxu0 %v129
    %v469 = vpop.f32.mrf.mxu0
    %v470 = vadd.f32 0.0, %v469
    %v471 = vpop.f32.mrf.mxu0
    %v472 = vadd.f32 0.0, %v471
    %473 = vmatmul.bf16.gmra.mxu0 %v130
    %v474 = vpop.f32.mrf.mxu0
    %v475 = vadd.f32 0.0, %v474
    %v476 = vpop.f32.mrf.mxu0
    %v477 = vadd.f32 0.0, %v476
    %478 = vmatmul.bf16.gmra.mxu0 %v131
    %v479 = vpop.f32.mrf.mxu0
    %v480 = vadd.f32 0.0, %v479
    %v481 = vpop.f32.mrf.mxu0
    %v482 = vadd.f32 0.0, %v481
    %483 = vmatmul.bf16.gmra.mxu0 %v132
    %v484 = vpop.f32.mrf.mxu0
    %v485 = vadd.f32 0.0, %v484
    %v486 = vpop.f32.mrf.mxu0
    %v487 = vadd.f32 0.0, %v486
    %488 = vmatmul.bf16.gmra.mxu0 %v133
    %v489 = vpop.f32.mrf.mxu0
    %v490 = vadd.f32 0.0, %v489
    %v491 = vpop.f32.mrf.mxu0
    %v492 = vadd.f32 0.0, %v491
    %493 = vmatmul.bf16.gmra.mxu0 %v134
    %v494 = vpop.f32.mrf.mxu0
    %v495 = vadd.f32 0.0, %v494
    %v496 = vpop.f32.mrf.mxu0
    %v497 = vadd.f32 0.0, %v496
    %498 = vdwg.mxu0
    %v499 = vadd.f32 %v313, %v315
    %v500 = vadd.f32 %v499, %v318
    %v501 = vadd.f32 %v500, %v320
    %v502 = vadd.f32 %v501, %v323
    %v503 = vadd.f32 %v502, %v325
    %v504 = vadd.f32 %v503, %v328
    %v505 = vadd.f32 %v504, %v330
    %v506 = vadd.f32 %v505, %v333
    %v507 = vadd.f32 %v506, %v335
    %v508 = vadd.f32 %v507, %v338
    %v509 = vadd.f32 %v508, %v340
    %v510 = vadd.f32 %v509, %v343
    %v511 = vadd.f32 %v510, %v345
    %v512 = vadd.f32 %v511, %v348
    %v513 = vadd.f32 %v512, %v350
    %v514 = vrot.slane %v513, 4
    %v515 = vadd.f32 %v513, %v514
    %v516 = vrot.slane %v515, 2
    %v517 = vadd.f32 %v515, %v516
    %v518 = vrot.slane %v517, 1
    %v519 = vadd.f32 %v517, %v518
    %v520 = vadd.f32 %v362, %v364
    %v521 = vadd.f32 %v520, %v367
    %v522 = vadd.f32 %v521, %v369
    %v523 = vadd.f32 %v522, %v372
    %v524 = vadd.f32 %v523, %v374
    %v525 = vadd.f32 %v524, %v377
    %v526 = vadd.f32 %v525, %v379
    %v527 = vadd.f32 %v526, %v382
    %v528 = vadd.f32 %v527, %v384
    %v529 = vadd.f32 %v528, %v387
    %v530 = vadd.f32 %v529, %v389
    %v531 = vadd.f32 %v530, %v392
    %v532 = vadd.f32 %v531, %v394
    %v533 = vadd.f32 %v532, %v397
    %v534 = vadd.f32 %v533, %v399
    %v535 = vrot.slane %v534, 4
    %v536 = vadd.f32 %v534, %v535
    %v537 = vrot.slane %v536, 2
    %v538 = vadd.f32 %v536, %v537
    %v539 = vrot.slane %v538, 1
    %v540 = vadd.f32 %v538, %v539
    %v541 = vadd.f32 %v411, %v413
    %v542 = vadd.f32 %v541, %v416
    %v543 = vadd.f32 %v542, %v418
    %v544 = vadd.f32 %v543, %v421
    %v545 = vadd.f32 %v544, %v423
    %v546 = vadd.f32 %v545, %v426
    %v547 = vadd.f32 %v546, %v428
    %v548 = vadd.f32 %v547, %v431
    %v549 = vadd.f32 %v548, %v433
    %v550 = vadd.f32 %v549, %v436
    %v551 = vadd.f32 %v550, %v438
    %v552 = vadd.f32 %v551, %v441
    %v553 = vadd.f32 %v552, %v443
    %v554 = vadd.f32 %v553, %v446
    %v555 = vadd.f32 %v554, %v448
    %v556 = vrot.slane %v555, 4
    %v557 = vadd.f32 %v555, %v556
    %v558 = vrot.slane %v557, 2
    %v559 = vadd.f32 %v557, %v558
    %v560 = vrot.slane %v559, 1
    %v561 = vadd.f32 %v559, %v560
    %v562 = vadd.f32 %v460, %v462
    %v563 = vadd.f32 %v562, %v465
    %v564 = vadd.f32 %v563, %v467
    %v565 = vadd.f32 %v564, %v470
    %v566 = vadd.f32 %v565, %v472
    %v567 = vadd.f32 %v566, %v475
    %v568 = vadd.f32 %v567, %v477
    %v569 = vadd.f32 %v568, %v480
    %v570 = vadd.f32 %v569, %v482
    %v571 = vadd.f32 %v570, %v485
    %v572 = vadd.f32 %v571, %v487
    %v573 = vadd.f32 %v572, %v490
    %v574 = vadd.f32 %v573, %v492
    %v575 = vadd.f32 %v574, %v495
    %v576 = vadd.f32 %v575, %v497
    %v577 = vrot.slane %v576, 4
    %v578 = vadd.f32 %v576, %v577
    %v579 = vrot.slane %v578, 2
    %v580 = vadd.f32 %v578, %v579
    %v581 = vrot.slane %v580, 1
    %v582 = vadd.f32 %v580, %v581
    %v583 = vrcp.pop 128.0
    %v584 = vmul.f32 128.0, %v583
    %v585 = vsub.f32 1.0, %v584
    %v586 = vmul.f32 %v583, %v585
    %v587 = vadd.f32 %v583, %v586
    %vm588 = vweird.f32 %v583
    %v589 = vsel %vm588, %v583, %v587
    %v590 = vmul.f32 %v519, %v589
    %v591 = vmul.f32 %v540, %v589
    %v592 = vmul.f32 %v561, %v589
    %v593 = vmul.f32 %v582, %v589
    %v594 = vsub.f32 %v313, %v590
    %v595 = vsub.f32 %v362, %v591
    %v596 = vsub.f32 %v411, %v592
    %v597 = vsub.f32 %v460, %v593
    %v598 = vsub.f32 %v315, %v590
    %v599 = vsub.f32 %v364, %v591
    %v600 = vsub.f32 %v413, %v592
    %v601 = vsub.f32 %v462, %v593
    %v602 = vsub.f32 %v318, %v590
    %v603 = vsub.f32 %v367, %v591
    %v604 = vsub.f32 %v416, %v592
    %v605 = vsub.f32 %v465, %v593
    %v606 = vsub.f32 %v320, %v590
    %v607 = vsub.f32 %v369, %v591
    %v608 = vsub.f32 %v418, %v592
    %v609 = vsub.f32 %v467, %v593
    %v610 = vsub.f32 %v323, %v590
    %v611 = vsub.f32 %v372, %v591
    %v612 = vsub.f32 %v421, %v592
    %v613 = vsub.f32 %v470, %v593
    %v614 = vsub.f32 %v325, %v590
    %v615 = vsub.f32 %v374, %v591
    %v616 = vsub.f32 %v423, %v592
    %v617 = vsub.f32 %v472, %v593
    %v618 = vsub.f32 %v328, %v590
    %v619 = vsub.f32 %v377, %v591
    %v620 = vsub.f32 %v426, %v592
    %v621 = vsub.f32 %v475, %v593
    %v622 = vsub.f32 %v330, %v590
    %v623 = vsub.f32 %v379, %v591
    %v624 = vsub.f32 %v428, %v592
    %v625 = vsub.f32 %v477, %v593
    %v626 = vsub.f32 %v333, %v590
    %v627 = vsub.f32 %v382, %v591
    %v628 = vsub.f32 %v431, %v592
    %v629 = vsub.f32 %v480, %v593
    %v630 = vsub.f32 %v335, %v590
    %v631 = vsub.f32 %v384, %v591
    %v632 = vsub.f32 %v433, %v592
    %v633 = vsub.f32 %v482, %v593
    %v634 = vsub.f32 %v338, %v590
    %v635 = vsub.f32 %v387, %v591
    %v636 = vsub.f32 %v436, %v592
    %v637 = vsub.f32 %v485, %v593
    %v638 = vsub.f32 %v340, %v590
    %v639 = vsub.f32 %v389, %v591
    %v640 = vsub.f32 %v438, %v592
    %v641 = vsub.f32 %v487, %v593
    %v642 = vsub.f32 %v343, %v590
    %v643 = vsub.f32 %v392, %v591
    %v644 = vsub.f32 %v441, %v592
    %v645 = vsub.f32 %v490, %v593
    %v646 = vsub.f32 %v345, %v590
    %v647 = vsub.f32 %v394, %v591
    %v648 = vsub.f32 %v443, %v592
    %v649 = vsub.f32 %v492, %v593
    %v650 = vsub.f32 %v348, %v590
    %v651 = vsub.f32 %v397, %v591
    %v652 = vsub.f32 %v446, %v592
    %v653 = vsub.f32 %v495, %v593
    %v654 = vsub.f32 %v350, %v590
    %v655 = vsub.f32 %v399, %v591
    %v656 = vsub.f32 %v448, %v592
    %v657 = vsub.f32 %v497, %v593
    %v658 = vmul.f32 %v594, %v594
    %v659 = vmul.f32 %v595, %v595
    %v660 = vmul.f32 %v596, %v596
    %v661 = vmul.f32 %v597, %v597
    %v662 = vmul.f32 %v598, %v598
    %v663 = vmul.f32 %v599, %v599
    %v664 = vmul.f32 %v600, %v600
    %v665 = vmul.f32 %v601, %v601
    %v666 = vmul.f32 %v602, %v602
    %v667 = vmul.f32 %v603, %v603
    %v668 = vmul.f32 %v604, %v604
    %v669 = vmul.f32 %v605, %v605
    %v670 = vmul.f32 %v606, %v606
    %v671 = vmul.f32 %v607, %v607
    %v672 = vmul.f32 %v608, %v608
    %v673 = vmul.f32 %v609, %v609
    %v674 = vmul.f32 %v610, %v610
    %v675 = vmul.f32 %v611, %v611
    %v676 = vmul.f32 %v612, %v612
    %v677 = vmul.f32 %v613, %v613
    %v678 = vmul.f32 %v614, %v614
    %v679 = vmul.f32 %v615, %v615
    %v680 = vmul.f32 %v616, %v616
    %v681 = vmul.f32 %v617, %v617
    %v682 = vmul.f32 %v618, %v618
    %v683 = vmul.f32 %v619, %v619
    %v684 = vmul.f32 %v620, %v620
    %v685 = vmul.f32 %v621, %v621
    %v686 = vmul.f32 %v622, %v622
    %v687 = vmul.f32 %v623, %v623
    %v688 = vmul.f32 %v624, %v624
    %v689 = vmul.f32 %v625, %v625
    %v690 = vmul.f32 %v626, %v626
    %v691 = vmul.f32 %v627, %v627
    %v692 = vmul.f32 %v628, %v628
    %v693 = vmul.f32 %v629, %v629
    %v694 = vmul.f32 %v630, %v630
    %v695 = vmul.f32 %v631, %v631
    %v696 = vmul.f32 %v632, %v632
    %v697 = vmul.f32 %v633, %v633
    %v698 = vmul.f32 %v634, %v634
    %v699 = vmul.f32 %v635, %v635
    %v700 = vmul.f32 %v636, %v636
    %v701 = vmul.f32 %v637, %v637
    %v702 = vmul.f32 %v638, %v638
    %v703 = vmul.f32 %v639, %v639
    %v704 = vmul.f32 %v640, %v640
    %v705 = vmul.f32 %v641, %v641
    %v706 = vmul.f32 %v642, %v642
    %v707 = vmul.f32 %v643, %v643
    %v708 = vmul.f32 %v644, %v644
    %v709 = vmul.f32 %v645, %v645
    %v710 = vmul.f32 %v646, %v646
    %v711 = vmul.f32 %v647, %v647
    %v712 = vmul.f32 %v648, %v648
    %v713 = vmul.f32 %v649, %v649
    %v714 = vmul.f32 %v650, %v650
    %v715 = vmul.f32 %v651, %v651
    %v716 = vmul.f32 %v652, %v652
    %v717 = vmul.f32 %v653, %v653
    %v718 = vmul.f32 %v654, %v654
    %v719 = vmul.f32 %v655, %v655
    %v720 = vmul.f32 %v656, %v656
    %v721 = vmul.f32 %v657, %v657
    %v722 = vadd.f32 %v658, %v662
    %v723 = vadd.f32 %v722, %v666
    %v724 = vadd.f32 %v723, %v670
    %v725 = vadd.f32 %v724, %v674
    %v726 = vadd.f32 %v725, %v678
    %v727 = vadd.f32 %v726, %v682
    %v728 = vadd.f32 %v727, %v686
    %v729 = vadd.f32 %v728, %v690
    %v730 = vadd.f32 %v729, %v694
    %v731 = vadd.f32 %v730, %v698
    %v732 = vadd.f32 %v731, %v702
    %v733 = vadd.f32 %v732, %v706
    %v734 = vadd.f32 %v733, %v710
    %v735 = vadd.f32 %v734, %v714
    %v736 = vadd.f32 %v735, %v718
    %v737 = vrot.slane %v736, 4
    %v738 = vadd.f32 %v736, %v737
    %v739 = vrot.slane %v738, 2
    %v740 = vadd.f32 %v738, %v739
    %v741 = vrot.slane %v740, 1
    %v742 = vadd.f32 %v740, %v741
    %v743 = vadd.f32 %v659, %v663
    %v744 = vadd.f32 %v743, %v667
    %v745 = vadd.f32 %v744, %v671
    %v746 = vadd.f32 %v745, %v675
    %v747 = vadd.f32 %v746, %v679
    %v748 = vadd.f32 %v747, %v683
    %v749 = vadd.f32 %v748, %v687
    %v750 = vadd.f32 %v749, %v691
    %v751 = vadd.f32 %v750, %v695
    %v752 = vadd.f32 %v751, %v699
    %v753 = vadd.f32 %v752, %v703
    %v754 = vadd.f32 %v753, %v707
    %v755 = vadd.f32 %v754, %v711
    %v756 = vadd.f32 %v755, %v715
    %v757 = vadd.f32 %v756, %v719
    %v758 = vrot.slane %v757, 4
    %v759 = vadd.f32 %v757, %v758
    %v760 = vrot.slane %v759, 2
    %v761 = vadd.f32 %v759, %v760
    %v762 = vrot.slane %v761, 1
    %v763 = vadd.f32 %v761, %v762
    %v764 = vadd.f32 %v660, %v664
    %v765 = vadd.f32 %v764, %v668
    %v766 = vadd.f32 %v765, %v672
    %v767 = vadd.f32 %v766, %v676
    %v768 = vadd.f32 %v767, %v680
    %v769 = vadd.f32 %v768, %v684
    %v770 = vadd.f32 %v769, %v688
    %v771 = vadd.f32 %v770, %v692
    %v772 = vadd.f32 %v771, %v696
    %v773 = vadd.f32 %v772, %v700
    %v774 = vadd.f32 %v773, %v704
    %v775 = vadd.f32 %v774, %v708
    %v776 = vadd.f32 %v775, %v712
    %v777 = vadd.f32 %v776, %v716
    %v778 = vadd.f32 %v777, %v720
    %v779 = vrot.slane %v778, 4
    %v780 = vadd.f32 %v778, %v779
    %v781 = vrot.slane %v780, 2
    %v782 = vadd.f32 %v780, %v781
    %v783 = vrot.slane %v782, 1
    %v784 = vadd.f32 %v782, %v783
    %v785 = vadd.f32 %v661, %v665
    %v786 = vadd.f32 %v785, %v669
    %v787 = vadd.f32 %v786, %v673
    %v788 = vadd.f32 %v787, %v677
    %v789 = vadd.f32 %v788, %v681
    %v790 = vadd.f32 %v789, %v685
    %v791 = vadd.f32 %v790, %v689
    %v792 = vadd.f32 %v791, %v693
    %v793 = vadd.f32 %v792, %v697
    %v794 = vadd.f32 %v793, %v701
    %v795 = vadd.f32 %v794, %v705
    %v796 = vadd.f32 %v795, %v709
    %v797 = vadd.f32 %v796, %v713
    %v798 = vadd.f32 %v797, %v717
    %v799 = vadd.f32 %v798, %v721
    %v800 = vrot.slane %v799, 4
    %v801 = vadd.f32 %v799, %v800
    %v802 = vrot.slane %v801, 2
    %v803 = vadd.f32 %v801, %v802
    %v804 = vrot.slane %v803, 1
    %v805 = vadd.f32 %v803, %v804
    %v806 = vmul.f32 %v742, %v589
    %v807 = vmul.f32 %v763, %v589
    %v808 = vmul.f32 %v784, %v589
    %v809 = vmul.f32 %v805, %v589
    %v810 = vld [vmem:[#allocation4] ss:$4 sm:$0xf]
    %s811 = scalar_lea.vmem [#allocation4], 1
    %v812 = vld [vmem:[%s811] ss:$4 sm:$0xf]
    %v813 = vadd.f32 %v806, 1e-05
    %v814 = vadd.f32 %v807, 1e-05
    %v815 = vadd.f32 %v808, 1e-05
    %v816 = vadd.f32 %v809, 1e-05
    %v817 = vrsqrt.pop %v813
    %v818 = vmul.f32 %v817, %v813
    %v819 = vmul.f32 %v818, %v817
    %v820 = vmul.f32 0.5, %v819
    %v821 = vsub.f32 1.5, %v820
    %v822 = vmul.f32 %v817, %v821
    %vm823 = vweird.f32 %v813
    %vm824 = vweird.f32 %v817
    %vm825 = vmor %vm823, %vm824
    %v826 = vsel %vm825, %v817, %v822
    %v827 = vrsqrt.pop %v814
    %v828 = vmul.f32 %v827, %v814
    %v829 = vmul.f32 %v828, %v827
    %v830 = vmul.f32 0.5, %v829
    %v831 = vsub.f32 1.5, %v830
    %v832 = vmul.f32 %v827, %v831
    %vm833 = vweird.f32 %v814
    %vm834 = vweird.f32 %v827
    %vm835 = vmor %vm833, %vm834
    %v836 = vsel %vm835, %v827, %v832
    %v837 = vrsqrt.pop %v815
    %v838 = vmul.f32 %v837, %v815
    %v839 = vmul.f32 %v838, %v837
    %v840 = vmul.f32 0.5, %v839
    %v841 = vsub.f32 1.5, %v840
    %v842 = vmul.f32 %v837, %v841
    %vm843 = vweird.f32 %v815
    %vm844 = vweird.f32 %v837
    %vm845 = vmor %vm843, %vm844
    %v846 = vsel %vm845, %v837, %v842
    %v847 = vrsqrt.pop %v816
    %v848 = vmul.f32 %v847, %v816
    %v849 = vmul.f32 %v848, %v847
    %v850 = vmul.f32 0.5, %v849
    %v851 = vsub.f32 1.5, %v850
    %v852 = vmul.f32 %v847, %v851
    %vm853 = vweird.f32 %v816
    %vm854 = vweird.f32 %v847
    %vm855 = vmor %vm853, %vm854
    %v856 = vsel %vm855, %v847, %v852
    %v861 = vrot.slane %v836, 7
    %v862 = vrot.slane %v846, 6
    %v863 = vrot.slane %v856, 5
    %vm864 = vcmask 1040384
    %v865 = vsel %vm864, %v826, %v861
    %vm866 = vcmask 1042434
    %v867 = vsel %vm866, %v862, %v863
    %vm868 = vcmask 1041408
    %v869 = vsel %vm868, %v865, %v867
    %v871 = vmul.f32 %v810, %v869
    %v873 = vperm.slane %v871, 0
    %v874 = vperm.slane %v871, 1
    %v875 = vperm.slane %v871, 2
    %v876 = vperm.slane %v871, 3
    %v881 = vmul.f32 %v590, %v873
    %v882 = vmul.f32 %v591, %v874
    %v883 = vmul.f32 %v592, %v875
    %v884 = vmul.f32 %v593, %v876
    %v889 = vrot.slane %v882, 7
    %v890 = vrot.slane %v883, 6
    %v891 = vrot.slane %v884, 5
    %v892 = vsel %vm864, %v881, %v889
    %v893 = vsel %vm866, %v890, %v891
    %v894 = vsel %vm868, %v892, %v893
    %v896 = vsub.f32 %v812, %v894
    %v897 = vmul.f32 %v313, %v873
    %v898 = vmul.f32 %v362, %v874
    %v899 = vmul.f32 %v411, %v875
    %v900 = vmul.f32 %v460, %v876
    %v901 = vmul.f32 %v315, %v873
    %v902 = vmul.f32 %v364, %v874
    %v903 = vmul.f32 %v413, %v875
    %v904 = vmul.f32 %v462, %v876
    %v905 = vmul.f32 %v318, %v873
    %v906 = vmul.f32 %v367, %v874
    %v907 = vmul.f32 %v416, %v875
    %v908 = vmul.f32 %v465, %v876
    %v909 = vmul.f32 %v320, %v873
    %v910 = vmul.f32 %v369, %v874
    %v911 = vmul.f32 %v418, %v875
    %v912 = vmul.f32 %v467, %v876
    %v913 = vmul.f32 %v323, %v873
    %v914 = vmul.f32 %v372, %v874
    %v915 = vmul.f32 %v421, %v875
    %v916 = vmul.f32 %v470, %v876
    %v917 = vmul.f32 %v325, %v873
    %v918 = vmul.f32 %v374, %v874
    %v919 = vmul.f32 %v423, %v875
    %v920 = vmul.f32 %v472, %v876
    %v921 = vmul.f32 %v328, %v873
    %v922 = vmul.f32 %v377, %v874
    %v923 = vmul.f32 %v426, %v875
    %v924 = vmul.f32 %v475, %v876
    %v925 = vmul.f32 %v330, %v873
    %v926 = vmul.f32 %v379, %v874
    %v927 = vmul.f32 %v428, %v875
    %v928 = vmul.f32 %v477, %v876
    %v929 = vmul.f32 %v333, %v873
    %v930 = vmul.f32 %v382, %v874
    %v931 = vmul.f32 %v431, %v875
    %v932 = vmul.f32 %v480, %v876
    %v933 = vmul.f32 %v335, %v873
    %v934 = vmul.f32 %v384, %v874
    %v935 = vmul.f32 %v433, %v875
    %v936 = vmul.f32 %v482, %v876
    %v937 = vmul.f32 %v338, %v873
    %v938 = vmul.f32 %v387, %v874
    %v939 = vmul.f32 %v436, %v875
    %v940 = vmul.f32 %v485, %v876
    %v941 = vmul.f32 %v340, %v873
    %v942 = vmul.f32 %v389, %v874
    %v943 = vmul.f32 %v438, %v875
    %v944 = vmul.f32 %v487, %v876
    %v945 = vmul.f32 %v343, %v873
    %v946 = vmul.f32 %v392, %v874
    %v947 = vmul.f32 %v441, %v875
    %v948 = vmul.f32 %v490, %v876
    %v949 = vmul.f32 %v345, %v873
    %v950 = vmul.f32 %v394, %v874
    %v951 = vmul.f32 %v443, %v875
    %v952 = vmul.f32 %v492, %v876
    %v953 = vmul.f32 %v348, %v873
    %v954 = vmul.f32 %v397, %v874
    %v955 = vmul.f32 %v446, %v875
    %v956 = vmul.f32 %v495, %v876
    %v957 = vmul.f32 %v350, %v873
    %v958 = vmul.f32 %v399, %v874
    %v959 = vmul.f32 %v448, %v875
    %v960 = vmul.f32 %v497, %v876
    %v962 = vperm.slane %v896, 0
    %v963 = vperm.slane %v896, 1
    %v964 = vperm.slane %v896, 2
    %v965 = vperm.slane %v896, 3
    %v970 = vadd.f32 %v897, %v962
    %v971 = vadd.f32 %v898, %v963
    %v972 = vadd.f32 %v899, %v964
    %v973 = vadd.f32 %v900, %v965
    %v974 = vadd.f32 %v901, %v962
    %v975 = vadd.f32 %v902, %v963
    %v976 = vadd.f32 %v903, %v964
    %v977 = vadd.f32 %v904, %v965
    %v978 = vadd.f32 %v905, %v962
    %v979 = vadd.f32 %v906, %v963
    %v980 = vadd.f32 %v907, %v964
    %v981 = vadd.f32 %v908, %v965
    %v982 = vadd.f32 %v909, %v962
    %v983 = vadd.f32 %v910, %v963
    %v984 = vadd.f32 %v911, %v964
    %v985 = vadd.f32 %v912, %v965
    %v986 = vadd.f32 %v913, %v962
    %v987 = vadd.f32 %v914, %v963
    %v988 = vadd.f32 %v915, %v964
    %v989 = vadd.f32 %v916, %v965
    %v990 = vadd.f32 %v917, %v962
    %v991 = vadd.f32 %v918, %v963
    %v992 = vadd.f32 %v919, %v964
    %v993 = vadd.f32 %v920, %v965
    %v994 = vadd.f32 %v921, %v962
    %v995 = vadd.f32 %v922, %v963
    %v996 = vadd.f32 %v923, %v964
    %v997 = vadd.f32 %v924, %v965
    %v998 = vadd.f32 %v925, %v962
    %v999 = vadd.f32 %v926, %v963
    %v1000 = vadd.f32 %v927, %v964
    %v1001 = vadd.f32 %v928, %v965
    %v1002 = vadd.f32 %v929, %v962
    %v1003 = vadd.f32 %v930, %v963
    %v1004 = vadd.f32 %v931, %v964
    %v1005 = vadd.f32 %v932, %v965
    %v1006 = vadd.f32 %v933, %v962
    %v1007 = vadd.f32 %v934, %v963
    %v1008 = vadd.f32 %v935, %v964
    %v1009 = vadd.f32 %v936, %v965
    %v1010 = vadd.f32 %v937, %v962
    %v1011 = vadd.f32 %v938, %v963
    %v1012 = vadd.f32 %v939, %v964
    %v1013 = vadd.f32 %v940, %v965
    %v1014 = vadd.f32 %v941, %v962
    %v1015 = vadd.f32 %v942, %v963
    %v1016 = vadd.f32 %v943, %v964
    %v1017 = vadd.f32 %v944, %v965
    %v1018 = vadd.f32 %v945, %v962
    %v1019 = vadd.f32 %v946, %v963
    %v1020 = vadd.f32 %v947, %v964
    %v1021 = vadd.f32 %v948, %v965
    %v1022 = vadd.f32 %v949, %v962
    %v1023 = vadd.f32 %v950, %v963
    %v1024 = vadd.f32 %v951, %v964
    %v1025 = vadd.f32 %v952, %v965
    %v1026 = vadd.f32 %v953, %v962
    %v1027 = vadd.f32 %v954, %v963
    %v1028 = vadd.f32 %v955, %v964
    %v1029 = vadd.f32 %v956, %v965
    %v1030 = vadd.f32 %v957, %v962
    %v1031 = vadd.f32 %v958, %v963
    %v1032 = vadd.f32 %v959, %v964
    %v1033 = vadd.f32 %v960, %v965
    %v1034 = vmax.f32 %v970, 0.0
    %v1035 = vmax.f32 %v971, 0.0
    %v1036 = vmax.f32 %v972, 0.0
    %v1037 = vmax.f32 %v973, 0.0
    %v1038 = vmax.f32 %v974, 0.0
    %v1039 = vmax.f32 %v975, 0.0
    %v1040 = vmax.f32 %v976, 0.0
    %v1041 = vmax.f32 %v977, 0.0
    %v1042 = vmax.f32 %v978, 0.0
    %v1043 = vmax.f32 %v979, 0.0
    %v1044 = vmax.f32 %v980, 0.0
    %v1045 = vmax.f32 %v981, 0.0
    %v1046 = vmax.f32 %v982, 0.0
    %v1047 = vmax.f32 %v983, 0.0
    %v1048 = vmax.f32 %v984, 0.0
    %v1049 = vmax.f32 %v985, 0.0
    %v1050 = vmax.f32 %v986, 0.0
    %v1051 = vmax.f32 %v987, 0.0
    %v1052 = vmax.f32 %v988, 0.0
    %v1053 = vmax.f32 %v989, 0.0
    %v1054 = vmax.f32 %v990, 0.0
    %v1055 = vmax.f32 %v991, 0.0
    %v1056 = vmax.f32 %v992, 0.0
    %v1057 = vmax.f32 %v993, 0.0
    %v1058 = vmax.f32 %v994, 0.0
    %v1059 = vmax.f32 %v995, 0.0
    %v1060 = vmax.f32 %v996, 0.0
    %v1061 = vmax.f32 %v997, 0.0
    %v1062 = vmax.f32 %v998, 0.0
    %v1063 = vmax.f32 %v999, 0.0
    %v1064 = vmax.f32 %v1000, 0.0
    %v1065 = vmax.f32 %v1001, 0.0
    %v1066 = vmax.f32 %v1002, 0.0
    %v1067 = vmax.f32 %v1003, 0.0
    %v1068 = vmax.f32 %v1004, 0.0
    %v1069 = vmax.f32 %v1005, 0.0
    %v1070 = vmax.f32 %v1006, 0.0
    %v1071 = vmax.f32 %v1007, 0.0
    %v1072 = vmax.f32 %v1008, 0.0
    %v1073 = vmax.f32 %v1009, 0.0
    %v1074 = vmax.f32 %v1010, 0.0
    %v1075 = vmax.f32 %v1011, 0.0
    %v1076 = vmax.f32 %v1012, 0.0
    %v1077 = vmax.f32 %v1013, 0.0
    %v1078 = vmax.f32 %v1014, 0.0
    %v1079 = vmax.f32 %v1015, 0.0
    %v1080 = vmax.f32 %v1016, 0.0
    %v1081 = vmax.f32 %v1017, 0.0
    %v1082 = vmax.f32 %v1018, 0.0
    %v1083 = vmax.f32 %v1019, 0.0
    %v1084 = vmax.f32 %v1020, 0.0
    %v1085 = vmax.f32 %v1021, 0.0
    %v1086 = vmax.f32 %v1022, 0.0
    %v1087 = vmax.f32 %v1023, 0.0
    %v1088 = vmax.f32 %v1024, 0.0
    %v1089 = vmax.f32 %v1025, 0.0
    %v1090 = vmax.f32 %v1026, 0.0
    %v1091 = vmax.f32 %v1027, 0.0
    %v1092 = vmax.f32 %v1028, 0.0
    %v1093 = vmax.f32 %v1029, 0.0
    %v1094 = vmax.f32 %v1030, 0.0
    %v1095 = vmax.f32 %v1031, 0.0
    %v1096 = vmax.f32 %v1032, 0.0
    %v1097 = vmax.f32 %v1033, 0.0
    %v1098 = vpack.c.bf16 %v1038, %v1034
    %v1099 = vpack.c.bf16 %v1039, %v1035
    %v1100 = vpack.c.bf16 %v1040, %v1036
    %v1101 = vpack.c.bf16 %v1041, %v1037
    %v1102 = vpack.c.bf16 %v1046, %v1042
    %v1103 = vpack.c.bf16 %v1047, %v1043
    %v1104 = vpack.c.bf16 %v1048, %v1044
    %v1105 = vpack.c.bf16 %v1049, %v1045
    %v1106 = vpack.c.bf16 %v1054, %v1050
    %v1107 = vpack.c.bf16 %v1055, %v1051
    %v1108 = vpack.c.bf16 %v1056, %v1052
    %v1109 = vpack.c.bf16 %v1057, %v1053
    %v1110 = vpack.c.bf16 %v1062, %v1058
    %v1111 = vpack.c.bf16 %v1063, %v1059
    %v1112 = vpack.c.bf16 %v1064, %v1060
    %v1113 = vpack.c.bf16 %v1065, %v1061
    %v1114 = vpack.c.bf16 %v1070, %v1066
    %v1115 = vpack.c.bf16 %v1071, %v1067
    %v1116 = vpack.c.bf16 %v1072, %v1068
    %v1117 = vpack.c.bf16 %v1073, %v1069
    %v1118 = vpack.c.bf16 %v1078, %v1074
    %v1119 = vpack.c.bf16 %v1079, %v1075
    %v1120 = vpack.c.bf16 %v1080, %v1076
    %v1121 = vpack.c.bf16 %v1081, %v1077
    %v1122 = vpack.c.bf16 %v1086, %v1082
    %v1123 = vpack.c.bf16 %v1087, %v1083
    %v1124 = vpack.c.bf16 %v1088, %v1084
    %v1125 = vpack.c.bf16 %v1089, %v1085
    %v1126 = vpack.c.bf16 %v1094, %v1090
    %v1127 = vpack.c.bf16 %v1095, %v1091
    %v1128 = vpack.c.bf16 %v1096, %v1092
    %v1129 = vpack.c.bf16 %v1097, %v1093
    %v1130 = vld [vmem:[#allocation2] sm:$0xf]
    %v1131 = vld [vmem:[#allocation2 + $0x4] sm:$0xf]
    %v1132 = vld [vmem:[#allocation2 + $0x8] sm:$0xf]
    %v1133 = vld [vmem:[#allocation2 + $0xc] sm:$0xf]
    %v1134 = vld [vmem:[#allocation2 + $0x10] sm:$0xf]
    %v1135 = vld [vmem:[#allocation2 + $0x14] sm:$0xf]
    %v1136 = vld [vmem:[#allocation2 + $0x18] sm:$0xf]
    %v1137 = vld [vmem:[#allocation2 + $0x1c] sm:$0xf]
    %v1138 = vld [vmem:[#allocation2 + $0x20] sm:$0xf]
    %v1139 = vld [vmem:[#allocation2 + $0x24] sm:$0xf]
    %v1140 = vld [vmem:[#allocation2 + $0x28] sm:$0xf]
    %v1141 = vld [vmem:[#allocation2 + $0x2c] sm:$0xf]
    %v1142 = vld [vmem:[#allocation2 + $0x30] sm:$0xf]
    %v1143 = vld [vmem:[#allocation2 + $0x34] sm:$0xf]
    %v1144 = vld [vmem:[#allocation2 + $0x38] sm:$0xf]
    %v1145 = vld [vmem:[#allocation2 + $0x3c] sm:$0xf]
    %v1146 = vld [vmem:[#allocation2 + $0x40] sm:$0xf]
    %v1147 = vld [vmem:[#allocation2 + $0x44] sm:$0xf]
    %v1148 = vld [vmem:[#allocation2 + $0x48] sm:$0xf]
    %v1149 = vld [vmem:[#allocation2 + $0x4c] sm:$0xf]
    %v1150 = vld [vmem:[#allocation2 + $0x50] sm:$0xf]
    %v1151 = vld [vmem:[#allocation2 + $0x54] sm:$0xf]
    %v1152 = vld [vmem:[#allocation2 + $0x58] sm:$0xf]
    %v1153 = vld [vmem:[#allocation2 + $0x5c] sm:$0xf]
    %v1154 = vld [vmem:[#allocation2 + $0x60] sm:$0xf]
    %v1155 = vld [vmem:[#allocation2 + $0x64] sm:$0xf]
    %v1156 = vld [vmem:[#allocation2 + $0x68] sm:$0xf]
    %v1157 = vld [vmem:[#allocation2 + $0x6c] sm:$0xf]
    %v1158 = vld [vmem:[#allocation2 + $0x70] sm:$0xf]
    %v1159 = vld [vmem:[#allocation2 + $0x74] sm:$0xf]
    %v1160 = vld [vmem:[#allocation2 + $0x78] sm:$0xf]
    %v1161 = vld [vmem:[#allocation2 + $0x7c] sm:$0xf]
    %v1162 = vld [vmem:[#allocation2 + $0x80] sm:$0xf]
    %v1163 = vld [vmem:[#allocation2 + $0x84] sm:$0xf]
    %v1164 = vld [vmem:[#allocation2 + $0x88] sm:$0xf]
    %v1165 = vld [vmem:[#allocation2 + $0x8c] sm:$0xf]
    %v1166 = vld [vmem:[#allocation2 + $0x90] sm:$0xf]
    %v1167 = vld [vmem:[#allocation2 + $0x94] sm:$0xf]
    %v1168 = vld [vmem:[#allocation2 + $0x98] sm:$0xf]
    %v1169 = vld [vmem:[#allocation2 + $0x9c] sm:$0xf]
    %v1170 = vld [vmem:[#allocation2 + $0xa0] sm:$0xf]
    %v1171 = vld [vmem:[#allocation2 + $0xa4] sm:$0xf]
    %v1172 = vld [vmem:[#allocation2 + $0xa8] sm:$0xf]
    %v1173 = vld [vmem:[#allocation2 + $0xac] sm:$0xf]
    %v1174 = vld [vmem:[#allocation2 + $0xb0] sm:$0xf]
    %v1175 = vld [vmem:[#allocation2 + $0xb4] sm:$0xf]
    %v1176 = vld [vmem:[#allocation2 + $0xb8] sm:$0xf]
    %v1177 = vld [vmem:[#allocation2 + $0xbc] sm:$0xf]
    %v1178 = vld [vmem:[#allocation2 + $0xc0] sm:$0xf]
    %v1179 = vld [vmem:[#allocation2 + $0xc4] sm:$0xf]
    %v1180 = vld [vmem:[#allocation2 + $0xc8] sm:$0xf]
    %v1181 = vld [vmem:[#allocation2 + $0xcc] sm:$0xf]
    %v1182 = vld [vmem:[#allocation2 + $0xd0] sm:$0xf]
    %v1183 = vld [vmem:[#allocation2 + $0xd4] sm:$0xf]
    %v1184 = vld [vmem:[#allocation2 + $0xd8] sm:$0xf]
    %v1185 = vld [vmem:[#allocation2 + $0xdc] sm:$0xf]
    %v1186 = vld [vmem:[#allocation2 + $0xe0] sm:$0xf]
    %v1187 = vld [vmem:[#allocation2 + $0xe4] sm:$0xf]
    %v1188 = vld [vmem:[#allocation2 + $0xe8] sm:$0xf]
    %v1189 = vld [vmem:[#allocation2 + $0xec] sm:$0xf]
    %v1190 = vld [vmem:[#allocation2 + $0xf0] sm:$0xf]
    %v1191 = vld [vmem:[#allocation2 + $0xf4] sm:$0xf]
    %v1192 = vld [vmem:[#allocation2 + $0xf8] sm:$0xf]
    %v1193 = vld [vmem:[#allocation2 + $0xfc] sm:$0xf]
    %v1194 = vld [vmem:[#allocation4 + $0x2] sm:$0x1]
    %v1195 = vperm.slane %v1194, 0
    %v1260 = vunpack.c.l.b16 %v1130
    %v1261 = vunpack.c.l.b16 %v1131
    %v1262 = vunpack.c.l.b16 %v1132
    %v1263 = vunpack.c.l.b16 %v1133
    %v1264 = vunpack.c.l.b16 %v1134
    %v1265 = vunpack.c.l.b16 %v1135
    %v1266 = vunpack.c.l.b16 %v1136
    %v1267 = vunpack.c.l.b16 %v1137
    %v1268 = vunpack.c.l.b16 %v1138
    %v1269 = vunpack.c.l.b16 %v1139
    %v1270 = vunpack.c.l.b16 %v1140
    %v1271 = vunpack.c.l.b16 %v1141
    %v1272 = vunpack.c.l.b16 %v1142
    %v1273 = vunpack.c.l.b16 %v1143
    %v1274 = vunpack.c.l.b16 %v1144
    %v1275 = vunpack.c.l.b16 %v1145
    %v1276 = vunpack.c.l.b16 %v1146
    %v1277 = vunpack.c.l.b16 %v1147
    %v1278 = vunpack.c.l.b16 %v1148
    %v1279 = vunpack.c.l.b16 %v1149
    %v1280 = vunpack.c.l.b16 %v1150
    %v1281 = vunpack.c.l.b16 %v1151
    %v1282 = vunpack.c.l.b16 %v1152
    %v1283 = vunpack.c.l.b16 %v1153
    %v1284 = vunpack.c.l.b16 %v1154
    %v1285 = vunpack.c.l.b16 %v1155
    %v1286 = vunpack.c.l.b16 %v1156
    %v1287 = vunpack.c.l.b16 %v1157
    %v1288 = vunpack.c.l.b16 %v1158
    %v1289 = vunpack.c.l.b16 %v1159
    %v1290 = vunpack.c.l.b16 %v1160
    %v1291 = vunpack.c.l.b16 %v1161
    %v1292 = vunpack.c.l.b16 %v1162
    %v1293 = vunpack.c.l.b16 %v1163
    %v1294 = vunpack.c.l.b16 %v1164
    %v1295 = vunpack.c.l.b16 %v1165
    %v1296 = vunpack.c.l.b16 %v1166
    %v1297 = vunpack.c.l.b16 %v1167
    %v1298 = vunpack.c.l.b16 %v1168
    %v1299 = vunpack.c.l.b16 %v1169
    %v1300 = vunpack.c.l.b16 %v1170
    %v1301 = vunpack.c.l.b16 %v1171
    %v1302 = vunpack.c.l.b16 %v1172
    %v1303 = vunpack.c.l.b16 %v1173
    %v1304 = vunpack.c.l.b16 %v1174
    %v1305 = vunpack.c.l.b16 %v1175
    %v1306 = vunpack.c.l.b16 %v1176
    %v1307 = vunpack.c.l.b16 %v1177
    %v1308 = vunpack.c.l.b16 %v1178
    %v1309 = vunpack.c.l.b16 %v1179
    %v1310 = vunpack.c.l.b16 %v1180
    %v1311 = vunpack.c.l.b16 %v1181
    %v1312 = vunpack.c.l.b16 %v1182
    %v1313 = vunpack.c.l.b16 %v1183
    %v1314 = vunpack.c.l.b16 %v1184
    %v1315 = vunpack.c.l.b16 %v1185
    %v1316 = vunpack.c.l.b16 %v1186
    %v1317 = vunpack.c.l.b16 %v1187
    %v1318 = vunpack.c.l.b16 %v1188
    %v1319 = vunpack.c.l.b16 %v1189
    %v1320 = vunpack.c.l.b16 %v1190
    %v1321 = vunpack.c.l.b16 %v1191
    %v1322 = vunpack.c.l.b16 %v1192
    %v1323 = vunpack.c.l.b16 %v1193
    %v1324 = vpack.c.b16 %v1261, %v1260
    %v1325 = vpack.c.b16 %v1263, %v1262
    %v1326 = vpack.c.b16 %v1265, %v1264
    %v1327 = vpack.c.b16 %v1267, %v1266
    %v1328 = vpack.c.b16 %v1269, %v1268
    %v1329 = vpack.c.b16 %v1271, %v1270
    %v1330 = vpack.c.b16 %v1273, %v1272
    %v1331 = vpack.c.b16 %v1275, %v1274
    %v1332 = vpack.c.b16 %v1277, %v1276
    %v1333 = vpack.c.b16 %v1279, %v1278
    %v1334 = vpack.c.b16 %v1281, %v1280
    %v1335 = vpack.c.b16 %v1283, %v1282
    %v1336 = vpack.c.b16 %v1285, %v1284
    %v1337 = vpack.c.b16 %v1287, %v1286
    %v1338 = vpack.c.b16 %v1289, %v1288
    %v1339 = vpack.c.b16 %v1291, %v1290
    %v1340 = vpack.c.b16 %v1293, %v1292
    %v1341 = vpack.c.b16 %v1295, %v1294
    %v1342 = vpack.c.b16 %v1297, %v1296
    %v1343 = vpack.c.b16 %v1299, %v1298
    %v1344 = vpack.c.b16 %v1301, %v1300
    %v1345 = vpack.c.b16 %v1303, %v1302
    %v1346 = vpack.c.b16 %v1305, %v1304
    %v1347 = vpack.c.b16 %v1307, %v1306
    %v1348 = vpack.c.b16 %v1309, %v1308
    %v1349 = vpack.c.b16 %v1311, %v1310
    %v1350 = vpack.c.b16 %v1313, %v1312
    %v1351 = vpack.c.b16 %v1315, %v1314
    %v1352 = vpack.c.b16 %v1317, %v1316
    %v1353 = vpack.c.b16 %v1319, %v1318
    %v1354 = vpack.c.b16 %v1321, %v1320
    %v1355 = vpack.c.b16 %v1323, %v1322
    %1388 = vmatpush.bf16.msra.mxu0 %v1331
    %1389 = vmatpush.bf16.msra.mxu0 %v1330
    %1390 = vmatpush.bf16.msra.mxu0 %v1329
    %1391 = vmatpush.bf16.msra.mxu0 %v1328
    %1392 = vmatpush.bf16.msra.mxu0 %v1327
    %1393 = vmatpush.bf16.msra.mxu0 %v1326
    %1394 = vmatpush.bf16.msra.mxu0 %v1325
    %1395 = vmatpush.bf16.msra.mxu0 %v1324
    %1396 = vmatmul.bf16.gmra.mxu0 %v1098
    %v1397 = vpop.f32.mrf.mxu0
    %v1398 = vadd.f32 %v1195, %v1397
    %v1399 = vpop.f32.mrf.mxu0
    %v1400 = vadd.f32 %v1195, %v1399
    %1401 = vmatmul.bf16.gmra.mxu0 %v1102
    %v1402 = vpop.f32.mrf.mxu0
    %v1403 = vadd.f32 %v1195, %v1402
    %v1404 = vpop.f32.mrf.mxu0
    %v1405 = vadd.f32 %v1195, %v1404
    %1406 = vmatmul.bf16.gmra.mxu0 %v1106
    %v1407 = vpop.f32.mrf.mxu0
    %v1408 = vadd.f32 %v1195, %v1407
    %v1409 = vpop.f32.mrf.mxu0
    %v1410 = vadd.f32 %v1195, %v1409
    %1411 = vmatmul.bf16.gmra.mxu0 %v1110
    %v1412 = vpop.f32.mrf.mxu0
    %v1413 = vadd.f32 %v1195, %v1412
    %v1414 = vpop.f32.mrf.mxu0
    %v1415 = vadd.f32 %v1195, %v1414
    %1416 = vmatmul.bf16.gmra.mxu0 %v1114
    %v1417 = vpop.f32.mrf.mxu0
    %v1418 = vadd.f32 %v1195, %v1417
    %v1419 = vpop.f32.mrf.mxu0
    %v1420 = vadd.f32 %v1195, %v1419
    %1421 = vmatmul.bf16.gmra.mxu0 %v1118
    %v1422 = vpop.f32.mrf.mxu0
    %v1423 = vadd.f32 %v1195, %v1422
    %v1424 = vpop.f32.mrf.mxu0
    %v1425 = vadd.f32 %v1195, %v1424
    %1426 = vmatmul.bf16.gmra.mxu0 %v1122
    %v1427 = vpop.f32.mrf.mxu0
    %v1428 = vadd.f32 %v1195, %v1427
    %v1429 = vpop.f32.mrf.mxu0
    %v1430 = vadd.f32 %v1195, %v1429
    %1431 = vmatmul.bf16.gmra.mxu0 %v1126
    %v1432 = vpop.f32.mrf.mxu0
    %v1433 = vadd.f32 %v1195, %v1432
    %v1434 = vpop.f32.mrf.mxu0
    %v1435 = vadd.f32 %v1195, %v1434
    %1436 = vdwg.mxu0
    %1437 = vmatpush.bf16.msra.mxu0 %v1339
    %1438 = vmatpush.bf16.msra.mxu0 %v1338
    %1439 = vmatpush.bf16.msra.mxu0 %v1337
    %1440 = vmatpush.bf16.msra.mxu0 %v1336
    %1441 = vmatpush.bf16.msra.mxu0 %v1335
    %1442 = vmatpush.bf16.msra.mxu0 %v1334
    %1443 = vmatpush.bf16.msra.mxu0 %v1333
    %1444 = vmatpush.bf16.msra.mxu0 %v1332
    %1445 = vmatmul.bf16.gmra.mxu0 %v1099
    %v1446 = vpop.f32.mrf.mxu0
    %v1447 = vadd.f32 %v1398, %v1446
    %v1448 = vpop.f32.mrf.mxu0
    %v1449 = vadd.f32 %v1400, %v1448
    %1450 = vmatmul.bf16.gmra.mxu0 %v1103
    %v1451 = vpop.f32.mrf.mxu0
    %v1452 = vadd.f32 %v1403, %v1451
    %v1453 = vpop.f32.mrf.mxu0
    %v1454 = vadd.f32 %v1405, %v1453
    %1455 = vmatmul.bf16.gmra.mxu0 %v1107
    %v1456 = vpop.f32.mrf.mxu0
    %v1457 = vadd.f32 %v1408, %v1456
    %v1458 = vpop.f32.mrf.mxu0
    %v1459 = vadd.f32 %v1410, %v1458
    %1460 = vmatmul.bf16.gmra.mxu0 %v1111
    %v1461 = vpop.f32.mrf.mxu0
    %v1462 = vadd.f32 %v1413, %v1461
    %v1463 = vpop.f32.mrf.mxu0
    %v1464 = vadd.f32 %v1415, %v1463
    %1465 = vmatmul.bf16.gmra.mxu0 %v1115
    %v1466 = vpop.f32.mrf.mxu0
    %v1467 = vadd.f32 %v1418, %v1466
    %v1468 = vpop.f32.mrf.mxu0
    %v1469 = vadd.f32 %v1420, %v1468
    %1470 = vmatmul.bf16.gmra.mxu0 %v1119
    %v1471 = vpop.f32.mrf.mxu0
    %v1472 = vadd.f32 %v1423, %v1471
    %v1473 = vpop.f32.mrf.mxu0
    %v1474 = vadd.f32 %v1425, %v1473
    %1475 = vmatmul.bf16.gmra.mxu0 %v1123
    %v1476 = vpop.f32.mrf.mxu0
    %v1477 = vadd.f32 %v1428, %v1476
    %v1478 = vpop.f32.mrf.mxu0
    %v1479 = vadd.f32 %v1430, %v1478
    %1480 = vmatmul.bf16.gmra.mxu0 %v1127
    %v1481 = vpop.f32.mrf.mxu0
    %v1482 = vadd.f32 %v1433, %v1481
    %v1483 = vpop.f32.mrf.mxu0
    %v1484 = vadd.f32 %v1435, %v1483
    %1485 = vdwg.mxu0
    %1486 = vmatpush.bf16.msra.mxu0 %v1347
    %1487 = vmatpush.bf16.msra.mxu0 %v1346
    %1488 = vmatpush.bf16.msra.mxu0 %v1345
    %1489 = vmatpush.bf16.msra.mxu0 %v1344
    %1490 = vmatpush.bf16.msra.mxu0 %v1343
    %1491 = vmatpush.bf16.msra.mxu0 %v1342
    %1492 = vmatpush.bf16.msra.mxu0 %v1341
    %1493 = vmatpush.bf16.msra.mxu0 %v1340
    %1494 = vmatmul.bf16.gmra.mxu0 %v1100
    %v1495 = vpop.f32.mrf.mxu0
    %v1496 = vadd.f32 %v1447, %v1495
    %v1497 = vpop.f32.mrf.mxu0
    %v1498 = vadd.f32 %v1449, %v1497
    %1499 = vmatmul.bf16.gmra.mxu0 %v1104
    %v1500 = vpop.f32.mrf.mxu0
    %v1501 = vadd.f32 %v1452, %v1500
    %v1502 = vpop.f32.mrf.mxu0
    %v1503 = vadd.f32 %v1454, %v1502
    %1504 = vmatmul.bf16.gmra.mxu0 %v1108
    %v1505 = vpop.f32.mrf.mxu0
    %v1506 = vadd.f32 %v1457, %v1505
    %v1507 = vpop.f32.mrf.mxu0
    %v1508 = vadd.f32 %v1459, %v1507
    %1509 = vmatmul.bf16.gmra.mxu0 %v1112
    %v1510 = vpop.f32.mrf.mxu0
    %v1511 = vadd.f32 %v1462, %v1510
    %v1512 = vpop.f32.mrf.mxu0
    %v1513 = vadd.f32 %v1464, %v1512
    %1514 = vmatmul.bf16.gmra.mxu0 %v1116
    %v1515 = vpop.f32.mrf.mxu0
    %v1516 = vadd.f32 %v1467, %v1515
    %v1517 = vpop.f32.mrf.mxu0
    %v1518 = vadd.f32 %v1469, %v1517
    %1519 = vmatmul.bf16.gmra.mxu0 %v1120
    %v1520 = vpop.f32.mrf.mxu0
    %v1521 = vadd.f32 %v1472, %v1520
    %v1522 = vpop.f32.mrf.mxu0
    %v1523 = vadd.f32 %v1474, %v1522
    %1524 = vmatmul.bf16.gmra.mxu0 %v1124
    %v1525 = vpop.f32.mrf.mxu0
    %v1526 = vadd.f32 %v1477, %v1525
    %v1527 = vpop.f32.mrf.mxu0
    %v1528 = vadd.f32 %v1479, %v1527
    %1529 = vmatmul.bf16.gmra.mxu0 %v1128
    %v1530 = vpop.f32.mrf.mxu0
    %v1531 = vadd.f32 %v1482, %v1530
    %v1532 = vpop.f32.mrf.mxu0
    %v1533 = vadd.f32 %v1484, %v1532
    %1534 = vdwg.mxu0
    %1535 = vmatpush.bf16.msra.mxu0 %v1355
    %1536 = vmatpush.bf16.msra.mxu0 %v1354
    %1537 = vmatpush.bf16.msra.mxu0 %v1353
    %1538 = vmatpush.bf16.msra.mxu0 %v1352
    %1539 = vmatpush.bf16.msra.mxu0 %v1351
    %1540 = vmatpush.bf16.msra.mxu0 %v1350
    %1541 = vmatpush.bf16.msra.mxu0 %v1349
    %1542 = vmatpush.bf16.msra.mxu0 %v1348
    %1543 = vmatmul.bf16.gmra.mxu0 %v1101
    %v1544 = vpop.f32.mrf.mxu0
    %v1545 = vadd.f32 %v1496, %v1544
    %v1546 = vpop.f32.mrf.mxu0
    %v1547 = vadd.f32 %v1498, %v1546
    %1548 = vmatmul.bf16.gmra.mxu0 %v1105
    %v1549 = vpop.f32.mrf.mxu0
    %v1550 = vadd.f32 %v1501, %v1549
    %v1551 = vpop.f32.mrf.mxu0
    %v1552 = vadd.f32 %v1503, %v1551
    %1553 = vmatmul.bf16.gmra.mxu0 %v1109
    %v1554 = vpop.f32.mrf.mxu0
    %v1555 = vadd.f32 %v1506, %v1554
    %v1556 = vpop.f32.mrf.mxu0
    %v1557 = vadd.f32 %v1508, %v1556
    %1558 = vmatmul.bf16.gmra.mxu0 %v1113
    %v1559 = vpop.f32.mrf.mxu0
    %v1560 = vadd.f32 %v1511, %v1559
    %v1561 = vpop.f32.mrf.mxu0
    %v1562 = vadd.f32 %v1513, %v1561
    %1563 = vmatmul.bf16.gmra.mxu0 %v1117
    %v1564 = vpop.f32.mrf.mxu0
    %v1565 = vadd.f32 %v1516, %v1564
    %v1566 = vpop.f32.mrf.mxu0
    %v1567 = vadd.f32 %v1518, %v1566
    %1568 = vmatmul.bf16.gmra.mxu0 %v1121
    %v1569 = vpop.f32.mrf.mxu0
    %v1570 = vadd.f32 %v1521, %v1569
    %v1571 = vpop.f32.mrf.mxu0
    %v1572 = vadd.f32 %v1523, %v1571
    %1573 = vmatmul.bf16.gmra.mxu0 %v1125
    %v1574 = vpop.f32.mrf.mxu0
    %v1575 = vadd.f32 %v1526, %v1574
    %v1576 = vpop.f32.mrf.mxu0
    %v1577 = vadd.f32 %v1528, %v1576
    %1578 = vmatmul.bf16.gmra.mxu0 %v1129
    %v1579 = vpop.f32.mrf.mxu0
    %v1580 = vadd.f32 %v1531, %v1579
    %v1581 = vpop.f32.mrf.mxu0
    %v1582 = vadd.f32 %v1533, %v1581
    %1583 = vdwg.mxu0
    %1584 = vst [vmem:[%s4] sm:$0xff] %v1545
    %1585 = vst [vmem:[%s4 + $0x8] sm:$0xff] %v1547
    %1586 = vst [vmem:[%s4 + $0x10] sm:$0xff] %v1550
    %1587 = vst [vmem:[%s4 + $0x18] sm:$0xff] %v1552
    %1588 = vst [vmem:[%s4 + $0x20] sm:$0xff] %v1555
    %1589 = vst [vmem:[%s4 + $0x28] sm:$0xff] %v1557
    %1590 = vst [vmem:[%s4 + $0x30] sm:$0xff] %v1560
    %1591 = vst [vmem:[%s4 + $0x38] sm:$0xff] %v1562
    %1592 = vst [vmem:[%s4 + $0x40] sm:$0xff] %v1565
    %1593 = vst [vmem:[%s4 + $0x48] sm:$0xff] %v1567
    %1594 = vst [vmem:[%s4 + $0x50] sm:$0xff] %v1570
    %1595 = vst [vmem:[%s4 + $0x58] sm:$0xff] %v1572
    %1596 = vst [vmem:[%s4 + $0x60] sm:$0xff] %v1575
    %1597 = vst [vmem:[%s4 + $0x68] sm:$0xff] %v1577
    %1598 = vst [vmem:[%s4 + $0x70] sm:$0xff] %v1580
    %1599 = vst [vmem:[%s4 + $0x78] sm:$0xff] %v1582
    // Predicated region
    $region26: #{generator_forward.1} parent=1 // pred_check
      _
    $region27: #{generator_forward.1} parent=1 // pred_check_branch
      %1601 = sbr.rel (0) target = $region29
    $region28: #{generator_forward.1} parent=1 // pred_region
      _
    $region29: #{generator_forward.1} parent=1 // pred_fallthru
      _
    // Predicated region
    $region30: #{generator_forward.1} parent=1 // pred_check
      _
    $region31: #{generator_forward.1} parent=1 // pred_check_branch
      %1603 = sbr.rel (0) target = $region33
    $region32: #{generator_forward.1} parent=1 // pred_region
      _
    $region33: #{generator_forward.1} parent=1 // pred_fallthru
      _
    %1604 = vsyncpa [#allocation3], 1
    %1605 = vsyncpa [#allocation5], 1

</llo_original>
